<compile_context>
chip_gen: v7x
topology: tpu7x:2x2x1
jax: 0.10.0
libtpu: 0.0.40
codegen_flags: <defaults>
</compile_context>

<pallas_src>
import jax
import jax.numpy as jnp
from jax.experimental import pallas as pl
from jax.experimental.pallas import tpu as pltpu


def negspl_sg_kernel(c_ref, ctx_ref, neg_ref, u_ref, v_ref, out_ref,
                     lhs_scratch, xs_scratch):
    """c_ref (1,), ctx_ref (C,), neg_ref (NEG,) int32 in SMEM.
    u_ref (nwords, E), v_ref (nwords, E) f32 in VMEM.
    out_ref (1, 1) f32 in SMEM.
    lhs_scratch (R, E), xs_scratch (C, E) f32 VMEM scratch, R = roundup(1+NEG, 8).
    """
    C = xs_scratch.shape[0]
    NEG = neg_ref.shape[0]
    R = lhs_scratch.shape[0]
    n_valid = 1 + NEG

    # Zero the stacked-LHS scratch so the pad rows produce finite (masked) values.
    lhs_scratch[...] = jnp.zeros_like(lhs_scratch)

    # In-kernel gathers: center word row + negative-sample rows from u_emb.
    lhs_scratch[pl.ds(0, 1), :] = u_ref[pl.ds(c_ref[0], 1), :]
    for i in range(NEG):
        lhs_scratch[pl.ds(1 + i, 1), :] = u_ref[pl.ds(neg_ref[i], 1), :]

    # Context rows from v_emb, kept as (C, E) -- no transpose needed.
    for i in range(C):
        xs_scratch[pl.ds(i, 1), :] = v_ref[pl.ds(ctx_ref[i], 1), :]

    # Single fused MXU matmul: (R, E) x (C, E) contracting over E -> (R, C).
    logits = jax.lax.dot_general(
        lhs_scratch[...], xs_scratch[...],
        dimension_numbers=(((1,), (1,)), ((), ())),
        preferred_element_type=jnp.float32,
    )

    row = jax.lax.broadcasted_iota(jnp.int32, (R, 1), 0)
    sign = jnp.where(row == 0, 1.0, -1.0)              # +1 for the positive row
    valid = (row < n_valid).astype(jnp.float32)        # mask out zero-pad rows

    z = sign * logits
    # Stable log(sigmoid(z)) == min(z, 0) - log(1 + exp(-|z|))
    logsig = jnp.minimum(z, 0.0) - jnp.log(1.0 + jnp.exp(-jnp.abs(z)))

    out_ref[0, 0] = jnp.sum(valid * logsig)


def negspl_sg_forward(u_emb, v_emb, c_word, context, neg_idx):
    """Indices go to SMEM, full embedding tables go to VMEM; one kernel call."""
    c_arr = jnp.asarray([c_word], dtype=jnp.int32)       # (1,)
    ctx = jnp.asarray(context, dtype=jnp.int32)          # (C,)
    neg = jnp.asarray(neg_idx, dtype=jnp.int32)          # (NEG,)

    E = u_emb.shape[1]
    C = ctx.shape[0]
    NEG = neg.shape[0]
    R = ((1 + NEG + 7) // 8) * 8                          # pad rows to sublane mult.

    out = pl.pallas_call(
        negspl_sg_kernel,
        out_shape=jax.ShapeDtypeStruct((1, 1), jnp.float32),
        in_specs=[
            pl.BlockSpec(memory_space=pltpu.MemorySpace.SMEM),   # c_word
            pl.BlockSpec(memory_space=pltpu.MemorySpace.SMEM),   # context
            pl.BlockSpec(memory_space=pltpu.MemorySpace.SMEM),   # neg samples
            pl.BlockSpec(memory_space=pltpu.MemorySpace.VMEM),   # u_emb (whole)
            pl.BlockSpec(memory_space=pltpu.MemorySpace.VMEM),   # v_emb (whole)
        ],
        out_specs=pl.BlockSpec(memory_space=pltpu.MemorySpace.SMEM),
        scratch_shapes=[
            pltpu.VMEM((R, E), jnp.float32),   # stacked [xw ; xneg ; pad]
            pltpu.VMEM((C, E), jnp.float32),   # gathered context rows
        ],
    )(c_arr, ctx, neg, u_emb.astype(jnp.float32), v_emb.astype(jnp.float32))
    return out[0, 0]


def xavier_normal(key, shape):
    fan_in, fan_out = shape[1], shape[0]
    std = jnp.sqrt(2.0 / (fan_in + fan_out))
    return std * jax.random.normal(key, shape, dtype=jnp.float32)


def sample_negatives(key, weights, c_word, neg_size):
    # torch.multinomial(weights**0.75 with c_word zeroed, neg_size) w/o replacement
    wt = jnp.power(weights, 0.75)
    wt = wt / wt.sum()
    wt = wt.at[c_word].set(0.0)
    wt = wt / wt.sum()
    return jax.random.choice(key, weights.shape[0], (neg_size,), replace=False, p=wt)


def reference_forward(u_emb, v_emb, c_word, context, neg_idx):
    xw = u_emb[c_word]          # (E,)
    xs = v_emb[context].T       # (E, C)
    xneg = u_emb[neg_idx]       # (NEG, E)
    pos = jnp.log(jax.nn.sigmoid(xw @ xs)).sum()
    neg = jnp.log(1.0 - jax.nn.sigmoid(xneg @ xs)).sum()
    return pos + neg


if __name__ == "__main__":
    nwords = 64      # vocabulary size
    emb_size = 32    # embedding dim E
    neg_size = 8     # number of negative samples
    ctx_len = 8      # number of context words C

    key = jax.random.PRNGKey(0)
    k_u, k_v, k_ctx, k_neg, k_w = jax.random.split(key, 5)

    # Deterministic "xavier_normal" parameter init (shapes from nn.Embedding).
    u_emb = xavier_normal(k_u, (nwords, emb_size))
    v_emb = xavier_normal(k_v, (nwords, emb_size))

    # Synthetic unigram frequency weights (self.weights in the module).
    weights = jax.random.uniform(k_w, (nwords,), minval=1.0, maxval=10.0)

    c_word = 3  # center word index (scalar, as in the torch forward)
    context = jax.random.randint(k_ctx, (ctx_len,), 0, nwords)
    neg_idx = sample_negatives(k_neg, weights, c_word, neg_size)

    # TODO(synk): batching many (c_word, context) examples per call with a
    # "parallel" grid axis would amortize launch overhead / fill the MXU, but
    # the module's forward is single-example so that API is kept here.

    out = negspl_sg_forward(u_emb, v_emb, c_word, context, neg_idx)
    out = jax.block_until_ready(out)

    ref = reference_forward(u_emb, v_emb, c_word, context, neg_idx)
    assert jnp.allclose(out, ref, rtol=1e-5, atol=1e-5), (out, ref)

    print("KERNEL_OK")
</pallas_src>

<mosaic_0001>
module attributes {stable_mosaic.version = 11 : i64} {
  func.func @negspl_sg_kernel(%arg0: memref<1xi32, #tpu.memory_space<smem>>, %arg1: memref<8xi32, #tpu.memory_space<smem>>, %arg2: memref<8xi32, #tpu.memory_space<smem>>, %arg3: memref<64x32xf32, #tpu.memory_space<vmem>>, %arg4: memref<64x32xf32, #tpu.memory_space<vmem>>, %arg5: memref<1x1xf32, #tpu.memory_space<smem>>, %arg6: memref<16x32xf32, #tpu.memory_space<vmem>>, %arg7: memref<8x32xf32, #tpu.memory_space<vmem>>) attributes {dimension_semantics = [], scalar_prefetch = 0 : i64, scratch_operands = 2 : i64, tpu.core_type = #tpu.core_type<tc>} {
    %cst = arith.constant 0.000000e+00 : f32
    %0 = vector.broadcast %cst : f32 to vector<16x32xf32>
    %c0 = arith.constant 0 : index
    %c0_0 = arith.constant 0 : index
    %1 = vector.load %arg6[%c0, %c0_0] : memref<16x32xf32, #tpu.memory_space<vmem>>, vector<16x32xf32>
    tpu.vector_store %arg6[%c0, %c0_0], %0 {strides = array<i32>} : memref<16x32xf32, #tpu.memory_space<vmem>>, vector<16x32xf32>,
    %c0_1 = arith.constant 0 : index
    %2 = memref.load %arg0[%c0_1] : memref<1xi32, #tpu.memory_space<smem>>
    %3 = arith.index_cast %2 : i32 to index
    %c0_2 = arith.constant 0 : index
    %4 = vector.load %arg3[%3, %c0_2] : memref<64x32xf32, #tpu.memory_space<vmem>>, vector<1x32xf32>
    %c0_3 = arith.constant 0 : index
    %c0_4 = arith.constant 0 : index
    %5 = vector.load %arg6[%c0_3, %c0_4] : memref<16x32xf32, #tpu.memory_space<vmem>>, vector<1x32xf32>
    tpu.vector_store %arg6[%c0_3, %c0_4], %4 {strides = array<i32>} : memref<16x32xf32, #tpu.memory_space<vmem>>, vector<1x32xf32>,
    %c0_5 = arith.constant 0 : index
    %6 = memref.load %arg2[%c0_5] : memref<8xi32, #tpu.memory_space<smem>>
    %7 = arith.index_cast %6 : i32 to index
    %c0_6 = arith.constant 0 : index
    %8 = vector.load %arg3[%7, %c0_6] : memref<64x32xf32, #tpu.memory_space<vmem>>, vector<1x32xf32>
    %c1 = arith.constant 1 : index
    %c0_7 = arith.constant 0 : index
    %9 = vector.load %arg6[%c1, %c0_7] : memref<16x32xf32, #tpu.memory_space<vmem>>, vector<1x32xf32>
    tpu.vector_store %arg6[%c1, %c0_7], %8 {strides = array<i32>} : memref<16x32xf32, #tpu.memory_space<vmem>>, vector<1x32xf32>,
    %c1_8 = arith.constant 1 : index
    %10 = memref.load %arg2[%c1_8] : memref<8xi32, #tpu.memory_space<smem>>
    %11 = arith.index_cast %10 : i32 to index
    %c0_9 = arith.constant 0 : index
    %12 = vector.load %arg3[%11, %c0_9] : memref<64x32xf32, #tpu.memory_space<vmem>>, vector<1x32xf32>
    %c2 = arith.constant 2 : index
    %c0_10 = arith.constant 0 : index
    %13 = vector.load %arg6[%c2, %c0_10] : memref<16x32xf32, #tpu.memory_space<vmem>>, vector<1x32xf32>
    tpu.vector_store %arg6[%c2, %c0_10], %12 {strides = array<i32>} : memref<16x32xf32, #tpu.memory_space<vmem>>, vector<1x32xf32>,
    %c2_11 = arith.constant 2 : index
    %14 = memref.load %arg2[%c2_11] : memref<8xi32, #tpu.memory_space<smem>>
    %15 = arith.index_cast %14 : i32 to index
    %c0_12 = arith.constant 0 : index
    %16 = vector.load %arg3[%15, %c0_12] : memref<64x32xf32, #tpu.memory_space<vmem>>, vector<1x32xf32>
    %c3 = arith.constant 3 : index
    %c0_13 = arith.constant 0 : index
    %17 = vector.load %arg6[%c3, %c0_13] : memref<16x32xf32, #tpu.memory_space<vmem>>, vector<1x32xf32>
    tpu.vector_store %arg6[%c3, %c0_13], %16 {strides = array<i32>} : memref<16x32xf32, #tpu.memory_space<vmem>>, vector<1x32xf32>,
    %c3_14 = arith.constant 3 : index
    %18 = memref.load %arg2[%c3_14] : memref<8xi32, #tpu.memory_space<smem>>
    %19 = arith.index_cast %18 : i32 to index
    %c0_15 = arith.constant 0 : index
    %20 = vector.load %arg3[%19, %c0_15] : memref<64x32xf32, #tpu.memory_space<vmem>>, vector<1x32xf32>
    %c4 = arith.constant 4 : index
    %c0_16 = arith.constant 0 : index
    %21 = vector.load %arg6[%c4, %c0_16] : memref<16x32xf32, #tpu.memory_space<vmem>>, vector<1x32xf32>
    tpu.vector_store %arg6[%c4, %c0_16], %20 {strides = array<i32>} : memref<16x32xf32, #tpu.memory_space<vmem>>, vector<1x32xf32>,
    %c4_17 = arith.constant 4 : index
    %22 = memref.load %arg2[%c4_17] : memref<8xi32, #tpu.memory_space<smem>>
    %23 = arith.index_cast %22 : i32 to index
    %c0_18 = arith.constant 0 : index
    %24 = vector.load %arg3[%23, %c0_18] : memref<64x32xf32, #tpu.memory_space<vmem>>, vector<1x32xf32>
    %c5 = arith.constant 5 : index
    %c0_19 = arith.constant 0 : index
    %25 = vector.load %arg6[%c5, %c0_19] : memref<16x32xf32, #tpu.memory_space<vmem>>, vector<1x32xf32>
    tpu.vector_store %arg6[%c5, %c0_19], %24 {strides = array<i32>} : memref<16x32xf32, #tpu.memory_space<vmem>>, vector<1x32xf32>,
    %c5_20 = arith.constant 5 : index
    %26 = memref.load %arg2[%c5_20] : memref<8xi32, #tpu.memory_space<smem>>
    %27 = arith.index_cast %26 : i32 to index
    %c0_21 = arith.constant 0 : index
    %28 = vector.load %arg3[%27, %c0_21] : memref<64x32xf32, #tpu.memory_space<vmem>>, vector<1x32xf32>
    %c6 = arith.constant 6 : index
    %c0_22 = arith.constant 0 : index
    %29 = vector.load %arg6[%c6, %c0_22] : memref<16x32xf32, #tpu.memory_space<vmem>>, vector<1x32xf32>
    tpu.vector_store %arg6[%c6, %c0_22], %28 {strides = array<i32>} : memref<16x32xf32, #tpu.memory_space<vmem>>, vector<1x32xf32>,
    %c6_23 = arith.constant 6 : index
    %30 = memref.load %arg2[%c6_23] : memref<8xi32, #tpu.memory_space<smem>>
    %31 = arith.index_cast %30 : i32 to index
    %c0_24 = arith.constant 0 : index
    %32 = vector.load %arg3[%31, %c0_24] : memref<64x32xf32, #tpu.memory_space<vmem>>, vector<1x32xf32>
    %c7 = arith.constant 7 : index
    %c0_25 = arith.constant 0 : index
    %33 = vector.load %arg6[%c7, %c0_25] : memref<16x32xf32, #tpu.memory_space<vmem>>, vector<1x32xf32>
    tpu.vector_store %arg6[%c7, %c0_25], %32 {strides = array<i32>} : memref<16x32xf32, #tpu.memory_space<vmem>>, vector<1x32xf32>,
    %c7_26 = arith.constant 7 : index
    %34 = memref.load %arg2[%c7_26] : memref<8xi32, #tpu.memory_space<smem>>
    %35 = arith.index_cast %34 : i32 to index
    %c0_27 = arith.constant 0 : index
    %36 = vector.load %arg3[%35, %c0_27] : memref<64x32xf32, #tpu.memory_space<vmem>>, vector<1x32xf32>
    %c8 = arith.constant 8 : index
    %c0_28 = arith.constant 0 : index
    %37 = vector.load %arg6[%c8, %c0_28] : memref<16x32xf32, #tpu.memory_space<vmem>>, vector<1x32xf32>
    tpu.vector_store %arg6[%c8, %c0_28], %36 {strides = array<i32>} : memref<16x32xf32, #tpu.memory_space<vmem>>, vector<1x32xf32>,
    %c0_29 = arith.constant 0 : index
    %38 = memref.load %arg1[%c0_29] : memref<8xi32, #tpu.memory_space<smem>>
    %39 = arith.index_cast %38 : i32 to index
    %c0_30 = arith.constant 0 : index
    %40 = vector.load %arg4[%39, %c0_30] : memref<64x32xf32, #tpu.memory_space<vmem>>, vector<1x32xf32>
    %c0_31 = arith.constant 0 : index
    %c0_32 = arith.constant 0 : index
    %41 = vector.load %arg7[%c0_31, %c0_32] : memref<8x32xf32, #tpu.memory_space<vmem>>, vector<1x32xf32>
    tpu.vector_store %arg7[%c0_31, %c0_32], %40 {strides = array<i32>} : memref<8x32xf32, #tpu.memory_space<vmem>>, vector<1x32xf32>,
    %c1_33 = arith.constant 1 : index
    %42 = memref.load %arg1[%c1_33] : memref<8xi32, #tpu.memory_space<smem>>
    %43 = arith.index_cast %42 : i32 to index
    %c0_34 = arith.constant 0 : index
    %44 = vector.load %arg4[%43, %c0_34] : memref<64x32xf32, #tpu.memory_space<vmem>>, vector<1x32xf32>
    %c1_35 = arith.constant 1 : index
    %c0_36 = arith.constant 0 : index
    %45 = vector.load %arg7[%c1_35, %c0_36] : memref<8x32xf32, #tpu.memory_space<vmem>>, vector<1x32xf32>
    tpu.vector_store %arg7[%c1_35, %c0_36], %44 {strides = array<i32>} : memref<8x32xf32, #tpu.memory_space<vmem>>, vector<1x32xf32>,
    %c2_37 = arith.constant 2 : index
    %46 = memref.load %arg1[%c2_37] : memref<8xi32, #tpu.memory_space<smem>>
    %47 = arith.index_cast %46 : i32 to index
    %c0_38 = arith.constant 0 : index
    %48 = vector.load %arg4[%47, %c0_38] : memref<64x32xf32, #tpu.memory_space<vmem>>, vector<1x32xf32>
    %c2_39 = arith.constant 2 : index
    %c0_40 = arith.constant 0 : index
    %49 = vector.load %arg7[%c2_39, %c0_40] : memref<8x32xf32, #tpu.memory_space<vmem>>, vector<1x32xf32>
    tpu.vector_store %arg7[%c2_39, %c0_40], %48 {strides = array<i32>} : memref<8x32xf32, #tpu.memory_space<vmem>>, vector<1x32xf32>,
    %c3_41 = arith.constant 3 : index
    %50 = memref.load %arg1[%c3_41] : memref<8xi32, #tpu.memory_space<smem>>
    %51 = arith.index_cast %50 : i32 to index
    %c0_42 = arith.constant 0 : index
    %52 = vector.load %arg4[%51, %c0_42] : memref<64x32xf32, #tpu.memory_space<vmem>>, vector<1x32xf32>
    %c3_43 = arith.constant 3 : index
    %c0_44 = arith.constant 0 : index
    %53 = vector.load %arg7[%c3_43, %c0_44] : memref<8x32xf32, #tpu.memory_space<vmem>>, vector<1x32xf32>
    tpu.vector_store %arg7[%c3_43, %c0_44], %52 {strides = array<i32>} : memref<8x32xf32, #tpu.memory_space<vmem>>, vector<1x32xf32>,
    %c4_45 = arith.constant 4 : index
    %54 = memref.load %arg1[%c4_45] : memref<8xi32, #tpu.memory_space<smem>>
    %55 = arith.index_cast %54 : i32 to index
    %c0_46 = arith.constant 0 : index
    %56 = vector.load %arg4[%55, %c0_46] : memref<64x32xf32, #tpu.memory_space<vmem>>, vector<1x32xf32>
    %c4_47 = arith.constant 4 : index
    %c0_48 = arith.constant 0 : index
    %57 = vector.load %arg7[%c4_47, %c0_48] : memref<8x32xf32, #tpu.memory_space<vmem>>, vector<1x32xf32>
    tpu.vector_store %arg7[%c4_47, %c0_48], %56 {strides = array<i32>} : memref<8x32xf32, #tpu.memory_space<vmem>>, vector<1x32xf32>,
    %c5_49 = arith.constant 5 : index
    %58 = memref.load %arg1[%c5_49] : memref<8xi32, #tpu.memory_space<smem>>
    %59 = arith.index_cast %58 : i32 to index
    %c0_50 = arith.constant 0 : index
    %60 = vector.load %arg4[%59, %c0_50] : memref<64x32xf32, #tpu.memory_space<vmem>>, vector<1x32xf32>
    %c5_51 = arith.constant 5 : index
    %c0_52 = arith.constant 0 : index
    %61 = vector.load %arg7[%c5_51, %c0_52] : memref<8x32xf32, #tpu.memory_space<vmem>>, vector<1x32xf32>
    tpu.vector_store %arg7[%c5_51, %c0_52], %60 {strides = array<i32>} : memref<8x32xf32, #tpu.memory_space<vmem>>, vector<1x32xf32>,
    %c6_53 = arith.constant 6 : index
    %62 = memref.load %arg1[%c6_53] : memref<8xi32, #tpu.memory_space<smem>>
    %63 = arith.index_cast %62 : i32 to index
    %c0_54 = arith.constant 0 : index
    %64 = vector.load %arg4[%63, %c0_54] : memref<64x32xf32, #tpu.memory_space<vmem>>, vector<1x32xf32>
    %c6_55 = arith.constant 6 : index
    %c0_56 = arith.constant 0 : index
    %65 = vector.load %arg7[%c6_55, %c0_56] : memref<8x32xf32, #tpu.memory_space<vmem>>, vector<1x32xf32>
    tpu.vector_store %arg7[%c6_55, %c0_56], %64 {strides = array<i32>} : memref<8x32xf32, #tpu.memory_space<vmem>>, vector<1x32xf32>,
    %c7_57 = arith.constant 7 : index
    %66 = memref.load %arg1[%c7_57] : memref<8xi32, #tpu.memory_space<smem>>
    %67 = arith.index_cast %66 : i32 to index
    %c0_58 = arith.constant 0 : index
    %68 = vector.load %arg4[%67, %c0_58] : memref<64x32xf32, #tpu.memory_space<vmem>>, vector<1x32xf32>
    %c7_59 = arith.constant 7 : index
    %c0_60 = arith.constant 0 : index
    %69 = vector.load %arg7[%c7_59, %c0_60] : memref<8x32xf32, #tpu.memory_space<vmem>>, vector<1x32xf32>
    tpu.vector_store %arg7[%c7_59, %c0_60], %68 {strides = array<i32>} : memref<8x32xf32, #tpu.memory_space<vmem>>, vector<1x32xf32>,
    %c0_61 = arith.constant 0 : index
    %c0_62 = arith.constant 0 : index
    %70 = vector.load %arg6[%c0_61, %c0_62] : memref<16x32xf32, #tpu.memory_space<vmem>>, vector<16x32xf32>
    %c0_63 = arith.constant 0 : index
    %c0_64 = arith.constant 0 : index
    %71 = vector.load %arg7[%c0_63, %c0_64] : memref<8x32xf32, #tpu.memory_space<vmem>>, vector<8x32xf32>
    %cst_65 = arith.constant dense<0.000000e+00> : vector<16x8xf32>
    %72 = tpu.matmul %70, %71, %cst_65 {dimension_numbers = #tpu.dot_dimension_numbers<[1], [1], [0], [0], [0, 0, 1, 0], [], []>} : vector<16x32xf32>, vector<8x32xf32>, vector<16x8xf32> -> vector<16x8xf32>
    %73 = tpu.iota {dimensions = array<i32: 0>} : vector<16x1xi32>
    %c0_i32 = arith.constant 0 : i32
    %74 = vector.broadcast %c0_i32 : i32 to vector<16x1xi32>
    %75 = arith.cmpi eq, %73, %74 : vector<16x1xi32>
    %cst_66 = arith.constant 1.000000e+00 : f32
    %cst_67 = arith.constant -1.000000e+00 : f32
    %76 = vector.broadcast %cst_66 : f32 to vector<16x1xf32>
    %77 = vector.broadcast %cst_67 : f32 to vector<16x1xf32>
    %78 = arith.select %75, %76, %77 : vector<16x1xi1>, vector<16x1xf32>
    %c9_i32 = arith.constant 9 : i32
    %79 = vector.broadcast %c9_i32 : i32 to vector<16x1xi32>
    %80 = arith.cmpi slt, %73, %79 : vector<16x1xi32>
    %81 = arith.extui %80 : vector<16x1xi1> to vector<16x1xi32>
    %82 = arith.sitofp %81 : vector<16x1xi32> to vector<16x1xf32>
    %83 = vector.broadcast %78 : vector<16x1xf32> to vector<16x8xf32>
    %84 = arith.mulf %83, %72 : vector<16x8xf32>
    %cst_68 = arith.constant 0.000000e+00 : f32
    %85 = vector.broadcast %cst_68 : f32 to vector<16x8xf32>
    %86 = arith.minimumf %84, %85 : vector<16x8xf32>
    %87 = math.absf %84 : vector<16x8xf32>
    %cst_69 = arith.constant 0.000000e+00 : f32
    %88 = vector.broadcast %cst_69 : f32 to vector<16x8xf32>
    %89 = arith.subf %88, %87 : vector<16x8xf32>
    %90 = math.exp %89 : vector<16x8xf32>
    %cst_70 = arith.constant 1.000000e+00 : f32
    %91 = vector.broadcast %cst_70 : f32 to vector<16x8xf32>
    %92 = arith.addf %91, %90 : vector<16x8xf32>
    %93 = math.log %92 : vector<16x8xf32>
    %94 = arith.subf %86, %93 : vector<16x8xf32>
    %95 = vector.broadcast %82 : vector<16x1xf32> to vector<16x8xf32>
    %96 = arith.mulf %95, %94 : vector<16x8xf32>
    %97 = vector.shape_cast %96 : vector<16x8xf32> to vector<1x16x8xf32>
    %cst_71 = arith.constant dense<0.000000e+00> : vector<1xf32>
    %98 = vector.multi_reduction <add>, %97, %cst_71 [1, 2] : vector<1x16x8xf32> to vector<1xf32>
    %99 = vector.shape_cast %98 : vector<1xf32> to vector<1x1x1xf32>
    %100 = vector.extract %99[0, 0, 0] : f32 from vector<1x1x1xf32>
    %c0_72 = arith.constant 0 : index
    %c0_73 = arith.constant 0 : index
    %101 = memref.load %arg5[%c0_72, %c0_73] : memref<1x1xf32, #tpu.memory_space<smem>>
    memref.store %100, %arg5[%c0_72, %c0_73] : memref<1x1xf32, #tpu.memory_space<smem>>
    return
  }
}

</mosaic_0001>

<llo_original>
// kernel: tpu_custom_call.1
$region0: #{tpu_custom_call.1}
  #allocation0 [shape = 'u32[]', space=smem, size = 0x4, offset = 0x4, fixed_abs, tag = 'smem constant byte address 0x4 - core index']
  #allocation1 [shape = 'u32[144,128]{1,0:T(1,128)}', space=vmem, size = 0x12000, scoped, tag = 'internal scratch']
  #allocation2 [shape = 'f32[16,32]{1,0:T(8,128)}', space=vmem, size = 0x2000, scoped, tag = 'scratch operand']
  #allocation3 [shape = 'f32[8,32]{1,0:T(8,128)}', space=vmem, size = 0x1000, scoped, tag = 'scratch operand']
  #allocation4 [shape = 's32[1]{0:T(128)S(6)}', space=smem, size = 0x200, scoped, tag = 'scoped memory for tpu_custom_call.1']
  %s0 = inlined_call_operand.<no memory space> [shape: s32[1], index: 0, kind: input, shape index: {}]
  %s1 = inlined_call_operand.vmem [shape: s32[8], index: 1, kind: input, shape index: {}]
  %s2 = inlined_call_operand.vmem [shape: s32[8], index: 2, kind: input, shape index: {}]
  %s3 = inlined_call_operand.vmem [shape: f32[64,32], index: 3, kind: input, shape index: {}]
  %s4 = inlined_call_operand.vmem [shape: f32[64,32], index: 4, kind: input, shape index: {}]
  %s5 = inlined_call_operand.hbm [shape: f32[1,1], index: 5, kind: output, shape index: {}]
  %s6 = sld [smem:[#allocation0]]
  $region38: #{tpu_custom_call.1} parent=0
    _
  %s8 = ssub.s32 1, %s6
  %s9 = scalar_select 0, %s8, %s6
  %10 = sst [smem:[#allocation4]] %s0
  $region1: #{tpu_custom_call.1} parent=0
    #allocation5 [shape = 'u8[512]{0}', space=smem, size = 0x200, scoped, tag = 'input window, operand 1, single buffered']
    #allocation6 [shape = 's32[1]{0}', space=sflag, size = 0x4, scoped, tag = 'scoped memory for tpu_custom_call.1']
    #allocation7 [shape = 's32[1]{0}', space=sflag, size = 0x4, scoped, tag = 'scoped memory for tpu_custom_call.1']
    #allocation8 [shape = 'u8[512]{0}', space=smem, size = 0x200, scoped, tag = 'input window, operand 2, single buffered']
    #allocation9 [shape = 's32[1]{0}', space=sflag, size = 0x4, scoped, tag = 'scoped memory for tpu_custom_call.1']
    #allocation10 [shape = 'u8[512]{0}', space=smem, size = 0x200, scoped, tag = 'output window, operand 0, single buffered']
    %11 = vsyncpa [#allocation7], 0
    %12 = vsyncpa [#allocation9], 0
    %13 = vsyncpa [#allocation6], 0
    // Predicated region
    $region2: #{tpu_custom_call.1} parent=1 // pred_check
      _
    $region3: #{tpu_custom_call.1} parent=1 // pred_check_branch
      %15 = sbr.rel (0) target = $region5
    $region4: #{tpu_custom_call.1} parent=1 // pred_region
      _
    $region5: #{tpu_custom_call.1} parent=1 // pred_fallthru
      _
    // Predicated region
    $region6: #{tpu_custom_call.1} parent=1 // pred_check
      _
    $region7: #{tpu_custom_call.1} parent=1 // pred_check_branch
      %17 = sbr.rel (0) target = $region9
    $region8: #{tpu_custom_call.1} parent=1 // pred_region
      %s19 = ssub.s32 16, 16
      %20 = vsyncadd [#allocation7], %s19
      %s22 = sshll.u32 %s1, 4
      %s23 = int_to_ptr.vmem [resolvable:$true] %s22
      %25 = dma.vmem_to_smem %s23, 16, [#allocation5], [#allocation7]
    $region9: #{tpu_custom_call.1} parent=1 // pred_fallthru
      _
    // Predicated region
    $region10: #{tpu_custom_call.1} parent=1 // pred_check
      _
    $region11: #{tpu_custom_call.1} parent=1 // pred_check_branch
      %27 = sbr.rel (0) target = $region13
    $region12: #{tpu_custom_call.1} parent=1 // pred_region
      %s29 = ssub.s32 16, 16
      %30 = vsyncadd [#allocation9], %s29
      %s32 = sshll.u32 %s2, 4
      %s33 = int_to_ptr.vmem [resolvable:$true] %s32
      %35 = dma.vmem_to_smem %s33, 16, [#allocation8], [#allocation9]
    $region13: #{tpu_custom_call.1} parent=1 // pred_fallthru
      _
    // Predicated region
    $region14: #{tpu_custom_call.1} parent=1 // pred_check
      _
    $region15: #{tpu_custom_call.1} parent=1 // pred_check_branch
      %37 = sbr.rel (0) target = $region17
    $region16: #{tpu_custom_call.1} parent=1 // pred_region
      _
    $region17: #{tpu_custom_call.1} parent=1 // pred_fallthru
      _
    // Predicated region
    $region18: #{tpu_custom_call.1} parent=1 // pred_check
      _
    $region19: #{tpu_custom_call.1} parent=1 // pred_check_branch
      %39 = sbr.rel (0) target = $region21
    $region20: #{tpu_custom_call.1} parent=1 // pred_region
      _
    $region21: #{tpu_custom_call.1} parent=1 // pred_fallthru
      _
    // Predicated region
    $region22: #{tpu_custom_call.1} parent=1 // pred_check
      _
    $region23: #{tpu_custom_call.1} parent=1 // pred_check_branch
      %41 = sbr.rel (0) target = $region25
    $region24: #{tpu_custom_call.1} parent=1 // pred_region
      %42 = dma.done [#allocation7], 16
    $region25: #{tpu_custom_call.1} parent=1 // pred_fallthru
      _
    // Predicated region
    $region26: #{tpu_custom_call.1} parent=1 // pred_check
      _
    $region27: #{tpu_custom_call.1} parent=1 // pred_check_branch
      %44 = sbr.rel (0) target = $region29
    $region28: #{tpu_custom_call.1} parent=1 // pred_region
      %45 = dma.done [#allocation9], 16
    $region29: #{tpu_custom_call.1} parent=1 // pred_fallthru
      _
    %46 = sfence
    %vm47 = vcmask 261120
    %48 = vst.msk [vmem:[#allocation2] sm:$0xff] %vm47, 0.0
    %49 = vst.msk [vmem:[#allocation2 + $0x8] sm:$0xff] %vm47, 0.0
    %s50 = sld [smem:[#allocation4]]
    %s51 = scalar_lea.vmem %s3, %s50
    %v52 = vld [vmem:[%s51] sm:$0x1]
    %vm53 = vcmask 253952
    %54 = vst.msk [vmem:[#allocation2] sm:$0x1] %vm53, %v52
    %s55 = sld [smem:[#allocation8]]
    %s56 = scalar_lea.vmem %s3, %s55
    %v57 = vld [vmem:[%s56] sm:$0x1]
    %58 = vst.msk [vmem:[#allocation2 + $0x1] sm:$0x1] %vm53, %v57
    %s59 = sld [smem:[#allocation8 + $0x1]]
    %s60 = scalar_lea.vmem %s3, %s59
    %v61 = vld [vmem:[%s60] sm:$0x1]
    %62 = vst.msk [vmem:[#allocation2 + $0x2] sm:$0x1] %vm53, %v61
    %s63 = sld [smem:[#allocation8 + $0x2]]
    %s64 = scalar_lea.vmem %s3, %s63
    %v65 = vld [vmem:[%s64] sm:$0x1]
    %66 = vst.msk [vmem:[#allocation2 + $0x3] sm:$0x1] %vm53, %v65
    %s67 = sld [smem:[#allocation8 + $0x3]]
    %s68 = scalar_lea.vmem %s3, %s67
    %v69 = vld [vmem:[%s68] sm:$0x1]
    %70 = vst.msk [vmem:[#allocation2 + $0x4] sm:$0x1] %vm53, %v69
    %s71 = sld [smem:[#allocation8 + $0x4]]
    %s72 = scalar_lea.vmem %s3, %s71
    %v73 = vld [vmem:[%s72] sm:$0x1]
    %74 = vst.msk [vmem:[#allocation2 + $0x5] sm:$0x1] %vm53, %v73
    %s75 = sld [smem:[#allocation8 + $0x5]]
    %s76 = scalar_lea.vmem %s3, %s75
    %v77 = vld [vmem:[%s76] sm:$0x1]
    %78 = vst.msk [vmem:[#allocation2 + $0x6] sm:$0x1] %vm53, %v77
    %s79 = sld [smem:[#allocation8 + $0x6]]
    %s80 = scalar_lea.vmem %s3, %s79
    %v81 = vld [vmem:[%s80] sm:$0x1]
    %82 = vst.msk [vmem:[#allocation2 + $0x7] sm:$0x1] %vm53, %v81
    %s83 = sld [smem:[#allocation8 + $0x7]]
    %s84 = scalar_lea.vmem %s3, %s83
    %v85 = vld [vmem:[%s84] sm:$0x1]
    %86 = vst.msk [vmem:[#allocation2 + $0x8] sm:$0x1] %vm53, %v85
    %s87 = sld [smem:[#allocation5]]
    %s88 = scalar_lea.vmem %s4, %s87
    %v89 = vld [vmem:[%s88] sm:$0x1]
    %90 = vst.msk [vmem:[#allocation3] sm:$0x1] %vm53, %v89
    %s91 = sld [smem:[#allocation5 + $0x1]]
    %s92 = scalar_lea.vmem %s4, %s91
    %v93 = vld [vmem:[%s92] sm:$0x1]
    %94 = vst.msk [vmem:[#allocation3 + $0x1] sm:$0x1] %vm53, %v93
    %s95 = sld [smem:[#allocation5 + $0x2]]
    %s96 = scalar_lea.vmem %s4, %s95
    %v97 = vld [vmem:[%s96] sm:$0x1]
    %98 = vst.msk [vmem:[#allocation3 + $0x2] sm:$0x1] %vm53, %v97
    %s99 = sld [smem:[#allocation5 + $0x3]]
    %s100 = scalar_lea.vmem %s4, %s99
    %v101 = vld [vmem:[%s100] sm:$0x1]
    %102 = vst.msk [vmem:[#allocation3 + $0x3] sm:$0x1] %vm53, %v101
    %s103 = sld [smem:[#allocation5 + $0x4]]
    %s104 = scalar_lea.vmem %s4, %s103
    %v105 = vld [vmem:[%s104] sm:$0x1]
    %106 = vst.msk [vmem:[#allocation3 + $0x4] sm:$0x1] %vm53, %v105
    %s107 = sld [smem:[#allocation5 + $0x5]]
    %s108 = scalar_lea.vmem %s4, %s107
    %v109 = vld [vmem:[%s108] sm:$0x1]
    %110 = vst.msk [vmem:[#allocation3 + $0x5] sm:$0x1] %vm53, %v109
    %s111 = sld [smem:[#allocation5 + $0x6]]
    %s112 = scalar_lea.vmem %s4, %s111
    %v113 = vld [vmem:[%s112] sm:$0x1]
    %114 = vst.msk [vmem:[#allocation3 + $0x6] sm:$0x1] %vm53, %v113
    %s115 = sld [smem:[#allocation5 + $0x7]]
    %s116 = scalar_lea.vmem %s4, %s115
    %v117 = vld [vmem:[%s116] sm:$0x1]
    %118 = vst.msk [vmem:[#allocation3 + $0x7] sm:$0x1] %vm53, %v117
    %v119 = vld [vmem:[#allocation2] sm:$0xff]
    %v120 = vld [vmem:[#allocation2 + $0x8] sm:$0xff]
    %v121 = vld [vmem:[#allocation3] sm:$0xff]
    %v123 = vsel %vm47, %v119, 0
    %v126 = vsel %vm47, %v120, 0
    %v129 = vsel %vm47, %v121, 0
    %131 = vmatprep.subr.mxu0 0.0
    %132 = vmatpush1.xpose.msra.mxu0 %v129
    %133 = vmatprep.subr.mxu0 0.0
    %134 = vmatpush1.xpose.msra.mxu0 0.0
    %135 = vmatprep.subr.mxu0 0.0
    %136 = vmatpush1.xpose.msra.mxu0 0.0
    %137 = vmatprep.subr.mxu0 0.0
    %138 = vmatpush1.xpose.msra.mxu0 0.0
    %139 = vmatprep.subr.mxu0 0.0
    %140 = vmatpush1.xpose.msra.mxu0 0.0
    %141 = vmatprep.subr.mxu0 0.0
    %142 = vmatpush1.xpose.msra.mxu0 0.0
    %143 = vmatprep.subr.mxu0 0.0
    %144 = vmatpush1.xpose.msra.mxu0 0.0
    %145 = vmatprep.subr.mxu0 0.0
    %146 = vmatpush1.xpose.msra.mxu0 0.0
    %147 = vmatprep.subr.mxu0 0.0
    %148 = vmatpush1.xpose.msra.mxu0 0.0
    %149 = vmatprep.subr.mxu0 0.0
    %150 = vmatpush1.xpose.msra.mxu0 0.0
    %151 = vmatprep.subr.mxu0 0.0
    %152 = vmatpush1.xpose.msra.mxu0 0.0
    %153 = vmatprep.subr.mxu0 0.0
    %154 = vmatpush1.xpose.msra.mxu0 0.0
    %155 = vmatprep.subr.mxu0 0.0
    %156 = vmatpush1.xpose.msra.mxu0 0.0
    %157 = vmatprep.subr.mxu0 0.0
    %158 = vmatpush1.xpose.msra.mxu0 0.0
    %159 = vmatprep.subr.mxu0 0.0
    %160 = vmatpush1.xpose.msra.mxu0 0.0
    %161 = vmatprep.subr.mxu0 0.0
    %162 = vmatpush1.xpose.msra.mxu0 0.0
    %163 = vmatprep.subr.mxu0 0.0
    %164 = vmatpush1.xpose.msra.mxu0 0.0
    %165 = vmatprep.subr.mxu0 0.0
    %166 = vmatpush1.xpose.msra.mxu0 0.0
    %167 = vmatprep.subr.mxu0 0.0
    %168 = vmatpush1.xpose.msra.mxu0 0.0
    %169 = vmatprep.subr.mxu0 0.0
    %170 = vmatpush1.xpose.msra.mxu0 0.0
    %171 = vmatprep.subr.mxu0 0.0
    %172 = vmatpush1.xpose.msra.mxu0 0.0
    %173 = vmatprep.subr.mxu0 0.0
    %174 = vmatpush1.xpose.msra.mxu0 0.0
    %175 = vmatprep.subr.mxu0 0.0
    %176 = vmatpush1.xpose.msra.mxu0 0.0
    %177 = vmatprep.subr.mxu0 0.0
    %178 = vmatpush1.xpose.msra.mxu0 0.0
    %179 = vmatprep.subr.mxu0 0.0
    %180 = vmatpush1.xpose.msra.mxu0 0.0
    %181 = vmatprep.subr.mxu0 0.0
    %182 = vmatpush1.xpose.msra.mxu0 0.0
    %183 = vmatprep.subr.mxu0 0.0
    %184 = vmatpush1.xpose.msra.mxu0 0.0
    %185 = vmatprep.subr.mxu0 0.0
    %186 = vmatpush1.xpose.msra.mxu0 0.0
    %187 = vmatprep.subr.mxu0 0.0
    %188 = vmatpush1.xpose.msra.mxu0 0.0
    %189 = vmatprep.subr.mxu0 0.0
    %190 = vmatpush1.xpose.msra.mxu0 0.0
    %191 = vmatprep.subr.mxu0 0.0
    %192 = vmatpush1.xpose.msra.mxu0 0.0
    %193 = vmatprep.subr.mxu0 0.0
    %194 = vmatpush1.xpose.msra.mxu0 0.0
    %195 = vmatprep.mubr.f32.mxu0 0.0
    %196 = vmatmul.mubr.f32.gmra.mrb[0].mxu0 %v123
    %v197 = vpop.f32.mrb[0].mxu0
    %v198 = vadd.f32 0.0, %v197
    %v199 = vpop.f32.mrb[0].mxu0
    %200 = vmatprep.mubr.f32.mxu0 0.0
    %201 = vmatmul.mubr.f32.gmra.mrb[0].mxu0 %v126
    %v202 = vpop.f32.mrb[0].mxu0
    %v203 = vadd.f32 0.0, %v202
    %v204 = vpop.f32.mrb[0].mxu0
    %205 = vdwg.mxu0
    %v206 = vlaneseq
    %v207 = vshrl.u32 %v206, 7
    %v208 = vadd.s32 %v207, 8
    %vm209 = vcmp.eq.s32.totalorder %v207, 0
    %vm210 = vcmp.eq.s32.totalorder %v208, 0
    %v211 = vsel %vm209, 1.0, -1.0
    %v212 = vsel %vm210, 1.0, -1.0
    %vm213 = vcmp.lt.s32.totalorder %v207, 9
    %vm214 = vcmp.lt.s32.totalorder %v208, 9
    %v215 = vsel %vm213, 1, 0
    %v216 = vsel %vm214, 1, 0
    %v217 = vcvt.s32.f32 %v215
    %v218 = vcvt.s32.f32 %v216
    %v219 = vmul.f32 %v211, %v198
    %v220 = vmul.f32 %v212, %v203
    %v221 = vmin.f32 %v219, 0.0
    %v222 = vmin.f32 %v220, 0.0
    %v223 = vand.u32 2147483647, %v219
    %v224 = vand.u32 2147483647, %v220
    %v225 = vsub.f32 0.0, %v223
    %v226 = vsub.f32 0.0, %v224
    %v227 = vmul.f32 %v225, 1.442695
    %v228 = vpow.pop %v227
    %v229 = vmul.f32 %v226, 1.442695
    %v230 = vpow.pop %v229
    %v231 = vadd.f32 %v228, 1.0
    %v232 = vadd.f32 %v230, 1.0
    %v233 = vlog2.pop %v231
    %v234 = vmul.f32 %v233, 0.6931472
    %v235 = vlog2.pop %v232
    %v236 = vmul.f32 %v235, 0.6931472
    %v237 = vsub.f32 %v221, %v234
    %v238 = vsub.f32 %v222, %v236
    %v239 = vmul.f32 %v217, %v237
    %v240 = vmul.f32 %v218, %v238
    %vm241 = vcmask 64512
    %v242 = vsel %vm241, %v239, 0.0
    %v243 = vsel %vm241, %v240, 0.0
    %v244 = vadd.f32 %v242, %v243
    %245 = vadd.xlane.f32.xlu0 %v244
    %v246 = vpop.xlane.xlu0 %245
    %v247 = vrot.slane %v246, 4
    %v248 = vadd.f32 %v246, %v247
    %v249 = vrot.slane %v248, 2
    %v250 = vadd.f32 %v248, %v249
    %v251 = vrot.slane %v250, 1
    %v252 = vadd.f32 %v250, %v251
    %s253 = vtos %v252
    %s254 = scalar_lea.smem [#allocation10], 0
    %255 = sst [smem:[%s254]] %s253
    // Predicated region
    $region30: #{tpu_custom_call.1} parent=1 // pred_check
      _
    $region31: #{tpu_custom_call.1} parent=1 // pred_check_branch
      %257 = sbr.rel (0) target = $region33
    $region32: #{tpu_custom_call.1} parent=1 // pred_region
      %s259 = ssub.s32 16, 16
      %260 = vsyncadd [#allocation6], %s259
      %263 = dma.smem_to_hbm [#allocation10], 16, %s5, [#allocation6]
    $region33: #{tpu_custom_call.1} parent=1 // pred_fallthru
      _
    // Predicated region
    $region34: #{tpu_custom_call.1} parent=1 // pred_check
      _
    $region35: #{tpu_custom_call.1} parent=1 // pred_check_branch
      %265 = sbr.rel (0) target = $region37
    $region36: #{tpu_custom_call.1} parent=1 // pred_region
      %266 = dma.done [#allocation6], 16
    $region37: #{tpu_custom_call.1} parent=1 // pred_fallthru
      _
    %267 = sfence
    %268 = vsyncpa [#allocation6], 1
    %269 = vsyncpa [#allocation7], 1
    %270 = vsyncpa [#allocation9], 1

</llo_original>
